<compile_context>
chip_gen: v7x
topology: tpu7x:2x2x1
jax: 0.10.0
libtpu: 0.0.40
codegen_flags: <defaults>
</compile_context>

<pallas_src>
import functools

import jax
import jax.numpy as jnp
from jax.experimental import pallas as pl
from jax.experimental.pallas import tpu as pltpu


def _kwta_kernel(x_ref, o_ref, *, k, mag_bits, shift):
    x = x_ref[...]                                   # (C, TB): channels on sublanes
    bits = pltpu.bitcast(x.astype(jnp.float32), jnp.int32)

    # Order-preserving float32 -> int32 key:  a >= b  <=>  key(a) >= key(b).
    key = jnp.where(bits < 0, bits ^ jnp.int32(0x7FFFFFFF), bits)
    if shift:
        # bf16 upcast leaves only the top 16 pattern bits meaningful; >>16 is
        # an order-preserving bijection on that set -> 16-step search.
        key = key >> jnp.int32(shift)

    tb = key.shape[1]
    k_i = jnp.int32(k)
    low = -(1 << mag_bits)                           # lower bound of key domain

    def count_ge(th):                                # th: (1, TB) int32
        # Reduce over channels = sublane direction: mostly VPU vreg adds plus
        # a single cheap 8-wide collapse (keeps the 2 XLUs off the hot slot).
        return jnp.sum((key >= th).astype(jnp.int32), axis=0, keepdims=True)

    # Bitwise binary search (MSB first) for the k-th largest key per column:
    #   prefix = max{ T : #(key >= T) >= k }.
    # Sign bit first, then the magnitude bits, fully unrolled with static
    # constants; each step is one tile compare + sublane-direction reduce.
    zero = jnp.zeros((1, tb), jnp.int32)
    prefix = jnp.where(count_ge(zero) >= k_i, zero,
                       jnp.full((1, tb), low, jnp.int32))
    for j in range(mag_bits - 1, -1, -1):
        cand = prefix + jnp.int32(1 << j)
        prefix = jnp.where(count_ge(cand) >= k_i, cand, prefix)

    # Key-space epilogue: key >= prefix  <=>  x >= k-th largest value, so no
    # k-th value recovery pass is needed (only the sign of a zero output can
    # differ from torch's float compare on +/-0.0 ties).
    o_ref[...] = jnp.where(key >= prefix, x, jnp.zeros_like(x))


def _tile_budget_bytes():
    """Returns (per-pipeline-buffer budget, scoped VMEM limit).

    128-MiB-VMEM parts (v5e/v6e): 4 MiB buffers amortize the ~0.35us/step
    overhead for free.  64-MiB parts (v7x) -- or when the query is unavailable
    -- stay at 2 MiB so the unrolled search's int32 key / compare temporaries
    still fit comfortably next to the double-buffered tiles."""
    try:
        vmem = int(getattr(pltpu.get_tpu_info(), "vmem_capacity_bytes", 0))
    except Exception:
        vmem = 0
    if vmem >= 100 * 1024 * 1024:
        return 4 * 1024 * 1024, 64 * 1024 * 1024
    return 2 * 1024 * 1024, 32 * 1024 * 1024


def _pick_block_b(batch, channels, itemsize, budget):
    """Batch tile (lane dim): multiple of 128 for lane-dense loads/stores,
    sized to the per-buffer budget, and split into >=2 grid steps whenever the
    batch allows so both v7x TensorCores get work via "parallel" semantics."""
    b_aligned = ((batch + 127) // 128) * 128
    bytes_per_lane = max(channels * itemsize, 1)
    g = max(1, -(-(b_aligned * bytes_per_lane) // budget))   # ceil div
    if b_aligned >= 256:
        g = max(g, 2)
    bb = -(-b_aligned // (g * 128)) * 128
    return max(128, min(bb, b_aligned))


def sparsify1d(x, sparse_ratio=0.5, block_b=None):
    """kWTA along dim=1 of a (B, C) float array (Sparsify1D.forward)."""
    assert x.ndim == 2 and jnp.issubdtype(x.dtype, jnp.floating)
    B, C = x.shape
    k = int(sparse_ratio * C)                 # truncation matches the PyTorch code
    assert 1 <= k <= C, "int(sparse_ratio * C) must be in [1, C]"

    itemsize = jnp.dtype(x.dtype).itemsize
    if jnp.dtype(x.dtype) == jnp.dtype(jnp.bfloat16):
        mag_bits, shift = 15, 16              # 16-step search on bf16 patterns
    else:
        mag_bits, shift = 31, 0               # full 32-step search (f32 / f16)

    budget, vmem_limit = _tile_budget_bytes()
    if block_b is None:
        block_b = _pick_block_b(B, C, itemsize, budget)
    Bp = ((B + block_b - 1) // block_b) * block_b

    # Channels -> sublanes, batch -> lanes.  The channel dim is taken whole
    # (block dim == full array dim, so no (8,128) padding/masking is needed);
    # only the batch/lane dim is padded, and padded columns are sliced off.
    xt = x.T
    if Bp != B:
        xt = jnp.pad(xt, ((0, 0), (0, Bp - B)))

    kernel = functools.partial(_kwta_kernel, k=k, mag_bits=mag_bits, shift=shift)
    steps = mag_bits + 2
    out_t = pl.pallas_call(
        kernel,
        out_shape=jax.ShapeDtypeStruct((C, Bp), x.dtype),
        grid=(Bp // block_b,),
        in_specs=[pl.BlockSpec((C, block_b), lambda i: (0, i))],
        out_specs=pl.BlockSpec((C, block_b), lambda i: (0, i)),
        compiler_params=pltpu.CompilerParams(
            dimension_semantics=("parallel",),
            vmem_limit_bytes=vmem_limit),
        cost_estimate=pl.CostEstimate(
            flops=2 * steps * C * Bp,               # cmp + add per bit-step
            transcendentals=0,
            bytes_accessed=2 * C * Bp * itemsize),
    )(xt)

    out = out_t[:, :B] if Bp != B else out_t
    return out.T


def _reference(x, sparse_ratio=0.5):
    # Pure-JAX mirror of the PyTorch forward.
    k = int(sparse_ratio * x.shape[1])
    topval = jax.lax.top_k(x, k)[0][:, -1][:, None]
    comp = (x >= topval).astype(x.dtype)
    return comp * x


if __name__ == "__main__":
    key0 = jax.random.PRNGKey(0)
    B, C = 16, 32                                    # small (batch, hidden) demo
    x = jax.random.normal(key0, (B, C), dtype=jnp.float32)

    out = jax.block_until_ready(sparsify1d(x, sparse_ratio=0.5))
    assert out.shape == (B, C) and out.dtype == x.dtype
    assert jnp.array_equal(out, _reference(x, sparse_ratio=0.5)), "f32 mismatch"

    # Lane/batch padding path (B=10 -> padded to 128 lanes) and wider C.
    x2 = jax.random.normal(jax.random.PRNGKey(1), (10, 128), dtype=jnp.float32)
    out2 = jax.block_until_ready(sparsify1d(x2, sparse_ratio=0.25))
    assert jnp.array_equal(out2, _reference(x2, sparse_ratio=0.25)), "pad mismatch"

    # bf16 path exercises the 16-step key search.
    x3 = jax.random.normal(jax.random.PRNGKey(2), (8, 256), dtype=jnp.bfloat16)
    out3 = jax.block_until_ready(sparsify1d(x3, sparse_ratio=0.5))
    assert out3.dtype == jnp.bfloat16
    assert jnp.array_equal(out3, _reference(x3, sparse_ratio=0.5)), "bf16 mismatch"

    print("KERNEL_OK")
</pallas_src>

<mosaic_0001>
module attributes {stable_mosaic.version = 11 : i64} {
  func.func @_kwta_kernel(%arg0: i32, %arg1: memref<32x128xf32, #tpu.memory_space<vmem>>, %arg2: memref<32x128xf32, #tpu.memory_space<vmem>>) attributes {dimension_semantics = [#tpu.dimension_semantics<parallel>], iteration_bounds = array<i64: 1>, scalar_prefetch = 0 : i64, scratch_operands = 0 : i64, tpu.core_type = #tpu.core_type<tc>, window_params = [{transform_indices = @transform_0, window_bounds = array<i64: 32, 128>}, {transform_indices = @transform_1, window_bounds = array<i64: 32, 128>}]} {
    %c0 = arith.constant 0 : index
    %c0_0 = arith.constant 0 : index
    %0 = vector.load %arg1[%c0, %c0_0] : memref<32x128xf32, #tpu.memory_space<vmem>>, vector<32x128xf32>
    %1 = tpu.bitcast %0 : vector<32x128xf32> -> vector<32x128xi32>
    %c0_i32 = arith.constant 0 : i32
    %2 = vector.broadcast %c0_i32 : i32 to vector<32x128xi32>
    %3 = arith.cmpi slt, %1, %2 : vector<32x128xi32>
    %c2147483647_i32 = arith.constant 2147483647 : i32
    %4 = vector.broadcast %c2147483647_i32 : i32 to vector<32x128xi32>
    %5 = arith.xori %1, %4 : vector<32x128xi32>
    %6 = arith.select %3, %5, %1 : vector<32x128xi1>, vector<32x128xi32>
    %c0_i32_1 = arith.constant 0 : i32
    %7 = vector.broadcast %c0_i32_1 : i32 to vector<1x128xi32>
    %8 = vector.broadcast %7 : vector<1x128xi32> to vector<32x128xi32>
    %9 = arith.cmpi sge, %6, %8 : vector<32x128xi32>
    %10 = arith.extui %9 : vector<32x128xi1> to vector<32x128xi32>
    %cst = arith.constant dense<0> : vector<128xi32>
    %11 = vector.multi_reduction <add>, %10, %cst [0] : vector<32x128xi32> to vector<128xi32>
    %12 = vector.shape_cast %11 : vector<128xi32> to vector<1x128xi32>
    %c16_i32 = arith.constant 16 : i32
    %13 = vector.broadcast %c16_i32 : i32 to vector<1x128xi32>
    %14 = arith.cmpi sge, %12, %13 : vector<1x128xi32>
    %c-2147483648_i32 = arith.constant -2147483648 : i32
    %15 = vector.broadcast %c-2147483648_i32 : i32 to vector<1x128xi32>
    %16 = arith.select %14, %7, %15 : vector<1x128xi1>, vector<1x128xi32>
    %c1073741824_i32 = arith.constant 1073741824 : i32
    %17 = vector.broadcast %c1073741824_i32 : i32 to vector<1x128xi32>
    %18 = arith.addi %16, %17 : vector<1x128xi32>
    %19 = vector.broadcast %18 : vector<1x128xi32> to vector<32x128xi32>
    %20 = arith.cmpi sge, %6, %19 : vector<32x128xi32>
    %21 = arith.extui %20 : vector<32x128xi1> to vector<32x128xi32>
    %cst_2 = arith.constant dense<0> : vector<128xi32>
    %22 = vector.multi_reduction <add>, %21, %cst_2 [0] : vector<32x128xi32> to vector<128xi32>
    %23 = vector.shape_cast %22 : vector<128xi32> to vector<1x128xi32>
    %c16_i32_3 = arith.constant 16 : i32
    %24 = vector.broadcast %c16_i32_3 : i32 to vector<1x128xi32>
    %25 = arith.cmpi sge, %23, %24 : vector<1x128xi32>
    %26 = arith.select %25, %18, %16 : vector<1x128xi1>, vector<1x128xi32>
    %c536870912_i32 = arith.constant 536870912 : i32
    %27 = vector.broadcast %c536870912_i32 : i32 to vector<1x128xi32>
    %28 = arith.addi %26, %27 : vector<1x128xi32>
    %29 = vector.broadcast %28 : vector<1x128xi32> to vector<32x128xi32>
    %30 = arith.cmpi sge, %6, %29 : vector<32x128xi32>
    %31 = arith.extui %30 : vector<32x128xi1> to vector<32x128xi32>
    %cst_4 = arith.constant dense<0> : vector<128xi32>
    %32 = vector.multi_reduction <add>, %31, %cst_4 [0] : vector<32x128xi32> to vector<128xi32>
    %33 = vector.shape_cast %32 : vector<128xi32> to vector<1x128xi32>
    %c16_i32_5 = arith.constant 16 : i32
    %34 = vector.broadcast %c16_i32_5 : i32 to vector<1x128xi32>
    %35 = arith.cmpi sge, %33, %34 : vector<1x128xi32>
    %36 = arith.select %35, %28, %26 : vector<1x128xi1>, vector<1x128xi32>
    %c268435456_i32 = arith.constant 268435456 : i32
    %37 = vector.broadcast %c268435456_i32 : i32 to vector<1x128xi32>
    %38 = arith.addi %36, %37 : vector<1x128xi32>
    %39 = vector.broadcast %38 : vector<1x128xi32> to vector<32x128xi32>
    %40 = arith.cmpi sge, %6, %39 : vector<32x128xi32>
    %41 = arith.extui %40 : vector<32x128xi1> to vector<32x128xi32>
    %cst_6 = arith.constant dense<0> : vector<128xi32>
    %42 = vector.multi_reduction <add>, %41, %cst_6 [0] : vector<32x128xi32> to vector<128xi32>
    %43 = vector.shape_cast %42 : vector<128xi32> to vector<1x128xi32>
    %c16_i32_7 = arith.constant 16 : i32
    %44 = vector.broadcast %c16_i32_7 : i32 to vector<1x128xi32>
    %45 = arith.cmpi sge, %43, %44 : vector<1x128xi32>
    %46 = arith.select %45, %38, %36 : vector<1x128xi1>, vector<1x128xi32>
    %c134217728_i32 = arith.constant 134217728 : i32
    %47 = vector.broadcast %c134217728_i32 : i32 to vector<1x128xi32>
    %48 = arith.addi %46, %47 : vector<1x128xi32>
    %49 = vector.broadcast %48 : vector<1x128xi32> to vector<32x128xi32>
    %50 = arith.cmpi sge, %6, %49 : vector<32x128xi32>
    %51 = arith.extui %50 : vector<32x128xi1> to vector<32x128xi32>
    %cst_8 = arith.constant dense<0> : vector<128xi32>
    %52 = vector.multi_reduction <add>, %51, %cst_8 [0] : vector<32x128xi32> to vector<128xi32>
    %53 = vector.shape_cast %52 : vector<128xi32> to vector<1x128xi32>
    %c16_i32_9 = arith.constant 16 : i32
    %54 = vector.broadcast %c16_i32_9 : i32 to vector<1x128xi32>
    %55 = arith.cmpi sge, %53, %54 : vector<1x128xi32>
    %56 = arith.select %55, %48, %46 : vector<1x128xi1>, vector<1x128xi32>
    %c67108864_i32 = arith.constant 67108864 : i32
    %57 = vector.broadcast %c67108864_i32 : i32 to vector<1x128xi32>
    %58 = arith.addi %56, %57 : vector<1x128xi32>
    %59 = vector.broadcast %58 : vector<1x128xi32> to vector<32x128xi32>
    %60 = arith.cmpi sge, %6, %59 : vector<32x128xi32>
    %61 = arith.extui %60 : vector<32x128xi1> to vector<32x128xi32>
    %cst_10 = arith.constant dense<0> : vector<128xi32>
    %62 = vector.multi_reduction <add>, %61, %cst_10 [0] : vector<32x128xi32> to vector<128xi32>
    %63 = vector.shape_cast %62 : vector<128xi32> to vector<1x128xi32>
    %c16_i32_11 = arith.constant 16 : i32
    %64 = vector.broadcast %c16_i32_11 : i32 to vector<1x128xi32>
    %65 = arith.cmpi sge, %63, %64 : vector<1x128xi32>
    %66 = arith.select %65, %58, %56 : vector<1x128xi1>, vector<1x128xi32>
    %c33554432_i32 = arith.constant 33554432 : i32
    %67 = vector.broadcast %c33554432_i32 : i32 to vector<1x128xi32>
    %68 = arith.addi %66, %67 : vector<1x128xi32>
    %69 = vector.broadcast %68 : vector<1x128xi32> to vector<32x128xi32>
    %70 = arith.cmpi sge, %6, %69 : vector<32x128xi32>
    %71 = arith.extui %70 : vector<32x128xi1> to vector<32x128xi32>
    %cst_12 = arith.constant dense<0> : vector<128xi32>
    %72 = vector.multi_reduction <add>, %71, %cst_12 [0] : vector<32x128xi32> to vector<128xi32>
    %73 = vector.shape_cast %72 : vector<128xi32> to vector<1x128xi32>
    %c16_i32_13 = arith.constant 16 : i32
    %74 = vector.broadcast %c16_i32_13 : i32 to vector<1x128xi32>
    %75 = arith.cmpi sge, %73, %74 : vector<1x128xi32>
    %76 = arith.select %75, %68, %66 : vector<1x128xi1>, vector<1x128xi32>
    %c16777216_i32 = arith.constant 16777216 : i32
    %77 = vector.broadcast %c16777216_i32 : i32 to vector<1x128xi32>
    %78 = arith.addi %76, %77 : vector<1x128xi32>
    %79 = vector.broadcast %78 : vector<1x128xi32> to vector<32x128xi32>
    %80 = arith.cmpi sge, %6, %79 : vector<32x128xi32>
    %81 = arith.extui %80 : vector<32x128xi1> to vector<32x128xi32>
    %cst_14 = arith.constant dense<0> : vector<128xi32>
    %82 = vector.multi_reduction <add>, %81, %cst_14 [0] : vector<32x128xi32> to vector<128xi32>
    %83 = vector.shape_cast %82 : vector<128xi32> to vector<1x128xi32>
    %c16_i32_15 = arith.constant 16 : i32
    %84 = vector.broadcast %c16_i32_15 : i32 to vector<1x128xi32>
    %85 = arith.cmpi sge, %83, %84 : vector<1x128xi32>
    %86 = arith.select %85, %78, %76 : vector<1x128xi1>, vector<1x128xi32>
    %c8388608_i32 = arith.constant 8388608 : i32
    %87 = vector.broadcast %c8388608_i32 : i32 to vector<1x128xi32>
    %88 = arith.addi %86, %87 : vector<1x128xi32>
    %89 = vector.broadcast %88 : vector<1x128xi32> to vector<32x128xi32>
    %90 = arith.cmpi sge, %6, %89 : vector<32x128xi32>
    %91 = arith.extui %90 : vector<32x128xi1> to vector<32x128xi32>
    %cst_16 = arith.constant dense<0> : vector<128xi32>
    %92 = vector.multi_reduction <add>, %91, %cst_16 [0] : vector<32x128xi32> to vector<128xi32>
    %93 = vector.shape_cast %92 : vector<128xi32> to vector<1x128xi32>
    %c16_i32_17 = arith.constant 16 : i32
    %94 = vector.broadcast %c16_i32_17 : i32 to vector<1x128xi32>
    %95 = arith.cmpi sge, %93, %94 : vector<1x128xi32>
    %96 = arith.select %95, %88, %86 : vector<1x128xi1>, vector<1x128xi32>
    %c4194304_i32 = arith.constant 4194304 : i32
    %97 = vector.broadcast %c4194304_i32 : i32 to vector<1x128xi32>
    %98 = arith.addi %96, %97 : vector<1x128xi32>
    %99 = vector.broadcast %98 : vector<1x128xi32> to vector<32x128xi32>
    %100 = arith.cmpi sge, %6, %99 : vector<32x128xi32>
    %101 = arith.extui %100 : vector<32x128xi1> to vector<32x128xi32>
    %cst_18 = arith.constant dense<0> : vector<128xi32>
    %102 = vector.multi_reduction <add>, %101, %cst_18 [0] : vector<32x128xi32> to vector<128xi32>
    %103 = vector.shape_cast %102 : vector<128xi32> to vector<1x128xi32>
    %c16_i32_19 = arith.constant 16 : i32
    %104 = vector.broadcast %c16_i32_19 : i32 to vector<1x128xi32>
    %105 = arith.cmpi sge, %103, %104 : vector<1x128xi32>
    %106 = arith.select %105, %98, %96 : vector<1x128xi1>, vector<1x128xi32>
    %c2097152_i32 = arith.constant 2097152 : i32
    %107 = vector.broadcast %c2097152_i32 : i32 to vector<1x128xi32>
    %108 = arith.addi %106, %107 : vector<1x128xi32>
    %109 = vector.broadcast %108 : vector<1x128xi32> to vector<32x128xi32>
    %110 = arith.cmpi sge, %6, %109 : vector<32x128xi32>
    %111 = arith.extui %110 : vector<32x128xi1> to vector<32x128xi32>
    %cst_20 = arith.constant dense<0> : vector<128xi32>
    %112 = vector.multi_reduction <add>, %111, %cst_20 [0] : vector<32x128xi32> to vector<128xi32>
    %113 = vector.shape_cast %112 : vector<128xi32> to vector<1x128xi32>
    %c16_i32_21 = arith.constant 16 : i32
    %114 = vector.broadcast %c16_i32_21 : i32 to vector<1x128xi32>
    %115 = arith.cmpi sge, %113, %114 : vector<1x128xi32>
    %116 = arith.select %115, %108, %106 : vector<1x128xi1>, vector<1x128xi32>
    %c1048576_i32 = arith.constant 1048576 : i32
    %117 = vector.broadcast %c1048576_i32 : i32 to vector<1x128xi32>
    %118 = arith.addi %116, %117 : vector<1x128xi32>
    %119 = vector.broadcast %118 : vector<1x128xi32> to vector<32x128xi32>
    %120 = arith.cmpi sge, %6, %119 : vector<32x128xi32>
    %121 = arith.extui %120 : vector<32x128xi1> to vector<32x128xi32>
    %cst_22 = arith.constant dense<0> : vector<128xi32>
    %122 = vector.multi_reduction <add>, %121, %cst_22 [0] : vector<32x128xi32> to vector<128xi32>
    %123 = vector.shape_cast %122 : vector<128xi32> to vector<1x128xi32>
    %c16_i32_23 = arith.constant 16 : i32
    %124 = vector.broadcast %c16_i32_23 : i32 to vector<1x128xi32>
    %125 = arith.cmpi sge, %123, %124 : vector<1x128xi32>
    %126 = arith.select %125, %118, %116 : vector<1x128xi1>, vector<1x128xi32>
    %c524288_i32 = arith.constant 524288 : i32
    %127 = vector.broadcast %c524288_i32 : i32 to vector<1x128xi32>
    %128 = arith.addi %126, %127 : vector<1x128xi32>
    %129 = vector.broadcast %128 : vector<1x128xi32> to vector<32x128xi32>
    %130 = arith.cmpi sge, %6, %129 : vector<32x128xi32>
    %131 = arith.extui %130 : vector<32x128xi1> to vector<32x128xi32>
    %cst_24 = arith.constant dense<0> : vector<128xi32>
    %132 = vector.multi_reduction <add>, %131, %cst_24 [0] : vector<32x128xi32> to vector<128xi32>
    %133 = vector.shape_cast %132 : vector<128xi32> to vector<1x128xi32>
    %c16_i32_25 = arith.constant 16 : i32
    %134 = vector.broadcast %c16_i32_25 : i32 to vector<1x128xi32>
    %135 = arith.cmpi sge, %133, %134 : vector<1x128xi32>
    %136 = arith.select %135, %128, %126 : vector<1x128xi1>, vector<1x128xi32>
    %c262144_i32 = arith.constant 262144 : i32
    %137 = vector.broadcast %c262144_i32 : i32 to vector<1x128xi32>
    %138 = arith.addi %136, %137 : vector<1x128xi32>
    %139 = vector.broadcast %138 : vector<1x128xi32> to vector<32x128xi32>
    %140 = arith.cmpi sge, %6, %139 : vector<32x128xi32>
    %141 = arith.extui %140 : vector<32x128xi1> to vector<32x128xi32>
    %cst_26 = arith.constant dense<0> : vector<128xi32>
    %142 = vector.multi_reduction <add>, %141, %cst_26 [0] : vector<32x128xi32> to vector<128xi32>
    %143 = vector.shape_cast %142 : vector<128xi32> to vector<1x128xi32>
    %c16_i32_27 = arith.constant 16 : i32
    %144 = vector.broadcast %c16_i32_27 : i32 to vector<1x128xi32>
    %145 = arith.cmpi sge, %143, %144 : vector<1x128xi32>
    %146 = arith.select %145, %138, %136 : vector<1x128xi1>, vector<1x128xi32>
    %c131072_i32 = arith.constant 131072 : i32
    %147 = vector.broadcast %c131072_i32 : i32 to vector<1x128xi32>
    %148 = arith.addi %146, %147 : vector<1x128xi32>
    %149 = vector.broadcast %148 : vector<1x128xi32> to vector<32x128xi32>
    %150 = arith.cmpi sge, %6, %149 : vector<32x128xi32>
    %151 = arith.extui %150 : vector<32x128xi1> to vector<32x128xi32>
    %cst_28 = arith.constant dense<0> : vector<128xi32>
    %152 = vector.multi_reduction <add>, %151, %cst_28 [0] : vector<32x128xi32> to vector<128xi32>
    %153 = vector.shape_cast %152 : vector<128xi32> to vector<1x128xi32>
    %c16_i32_29 = arith.constant 16 : i32
    %154 = vector.broadcast %c16_i32_29 : i32 to vector<1x128xi32>
    %155 = arith.cmpi sge, %153, %154 : vector<1x128xi32>
    %156 = arith.select %155, %148, %146 : vector<1x128xi1>, vector<1x128xi32>
    %c65536_i32 = arith.constant 65536 : i32
    %157 = vector.broadcast %c65536_i32 : i32 to vector<1x128xi32>
    %158 = arith.addi %156, %157 : vector<1x128xi32>
    %159 = vector.broadcast %158 : vector<1x128xi32> to vector<32x128xi32>
    %160 = arith.cmpi sge, %6, %159 : vector<32x128xi32>
    %161 = arith.extui %160 : vector<32x128xi1> to vector<32x128xi32>
    %cst_30 = arith.constant dense<0> : vector<128xi32>
    %162 = vector.multi_reduction <add>, %161, %cst_30 [0] : vector<32x128xi32> to vector<128xi32>
    %163 = vector.shape_cast %162 : vector<128xi32> to vector<1x128xi32>
    %c16_i32_31 = arith.constant 16 : i32
    %164 = vector.broadcast %c16_i32_31 : i32 to vector<1x128xi32>
    %165 = arith.cmpi sge, %163, %164 : vector<1x128xi32>
    %166 = arith.select %165, %158, %156 : vector<1x128xi1>, vector<1x128xi32>
    %c32768_i32 = arith.constant 32768 : i32
    %167 = vector.broadcast %c32768_i32 : i32 to vector<1x128xi32>
    %168 = arith.addi %166, %167 : vector<1x128xi32>
    %169 = vector.broadcast %168 : vector<1x128xi32> to vector<32x128xi32>
    %170 = arith.cmpi sge, %6, %169 : vector<32x128xi32>
    %171 = arith.extui %170 : vector<32x128xi1> to vector<32x128xi32>
    %cst_32 = arith.constant dense<0> : vector<128xi32>
    %172 = vector.multi_reduction <add>, %171, %cst_32 [0] : vector<32x128xi32> to vector<128xi32>
    %173 = vector.shape_cast %172 : vector<128xi32> to vector<1x128xi32>
    %c16_i32_33 = arith.constant 16 : i32
    %174 = vector.broadcast %c16_i32_33 : i32 to vector<1x128xi32>
    %175 = arith.cmpi sge, %173, %174 : vector<1x128xi32>
    %176 = arith.select %175, %168, %166 : vector<1x128xi1>, vector<1x128xi32>
    %c16384_i32 = arith.constant 16384 : i32
    %177 = vector.broadcast %c16384_i32 : i32 to vector<1x128xi32>
    %178 = arith.addi %176, %177 : vector<1x128xi32>
    %179 = vector.broadcast %178 : vector<1x128xi32> to vector<32x128xi32>
    %180 = arith.cmpi sge, %6, %179 : vector<32x128xi32>
    %181 = arith.extui %180 : vector<32x128xi1> to vector<32x128xi32>
    %cst_34 = arith.constant dense<0> : vector<128xi32>
    %182 = vector.multi_reduction <add>, %181, %cst_34 [0] : vector<32x128xi32> to vector<128xi32>
    %183 = vector.shape_cast %182 : vector<128xi32> to vector<1x128xi32>
    %c16_i32_35 = arith.constant 16 : i32
    %184 = vector.broadcast %c16_i32_35 : i32 to vector<1x128xi32>
    %185 = arith.cmpi sge, %183, %184 : vector<1x128xi32>
    %186 = arith.select %185, %178, %176 : vector<1x128xi1>, vector<1x128xi32>
    %c8192_i32 = arith.constant 8192 : i32
    %187 = vector.broadcast %c8192_i32 : i32 to vector<1x128xi32>
    %188 = arith.addi %186, %187 : vector<1x128xi32>
    %189 = vector.broadcast %188 : vector<1x128xi32> to vector<32x128xi32>
    %190 = arith.cmpi sge, %6, %189 : vector<32x128xi32>
    %191 = arith.extui %190 : vector<32x128xi1> to vector<32x128xi32>
    %cst_36 = arith.constant dense<0> : vector<128xi32>
    %192 = vector.multi_reduction <add>, %191, %cst_36 [0] : vector<32x128xi32> to vector<128xi32>
    %193 = vector.shape_cast %192 : vector<128xi32> to vector<1x128xi32>
    %c16_i32_37 = arith.constant 16 : i32
    %194 = vector.broadcast %c16_i32_37 : i32 to vector<1x128xi32>
    %195 = arith.cmpi sge, %193, %194 : vector<1x128xi32>
    %196 = arith.select %195, %188, %186 : vector<1x128xi1>, vector<1x128xi32>
    %c4096_i32 = arith.constant 4096 : i32
    %197 = vector.broadcast %c4096_i32 : i32 to vector<1x128xi32>
    %198 = arith.addi %196, %197 : vector<1x128xi32>
    %199 = vector.broadcast %198 : vector<1x128xi32> to vector<32x128xi32>
    %200 = arith.cmpi sge, %6, %199 : vector<32x128xi32>
    %201 = arith.extui %200 : vector<32x128xi1> to vector<32x128xi32>
    %cst_38 = arith.constant dense<0> : vector<128xi32>
    %202 = vector.multi_reduction <add>, %201, %cst_38 [0] : vector<32x128xi32> to vector<128xi32>
    %203 = vector.shape_cast %202 : vector<128xi32> to vector<1x128xi32>
    %c16_i32_39 = arith.constant 16 : i32
    %204 = vector.broadcast %c16_i32_39 : i32 to vector<1x128xi32>
    %205 = arith.cmpi sge, %203, %204 : vector<1x128xi32>
    %206 = arith.select %205, %198, %196 : vector<1x128xi1>, vector<1x128xi32>
    %c2048_i32 = arith.constant 2048 : i32
    %207 = vector.broadcast %c2048_i32 : i32 to vector<1x128xi32>
    %208 = arith.addi %206, %207 : vector<1x128xi32>
    %209 = vector.broadcast %208 : vector<1x128xi32> to vector<32x128xi32>
    %210 = arith.cmpi sge, %6, %209 : vector<32x128xi32>
    %211 = arith.extui %210 : vector<32x128xi1> to vector<32x128xi32>
    %cst_40 = arith.constant dense<0> : vector<128xi32>
    %212 = vector.multi_reduction <add>, %211, %cst_40 [0] : vector<32x128xi32> to vector<128xi32>
    %213 = vector.shape_cast %212 : vector<128xi32> to vector<1x128xi32>
    %c16_i32_41 = arith.constant 16 : i32
    %214 = vector.broadcast %c16_i32_41 : i32 to vector<1x128xi32>
    %215 = arith.cmpi sge, %213, %214 : vector<1x128xi32>
    %216 = arith.select %215, %208, %206 : vector<1x128xi1>, vector<1x128xi32>
    %c1024_i32 = arith.constant 1024 : i32
    %217 = vector.broadcast %c1024_i32 : i32 to vector<1x128xi32>
    %218 = arith.addi %216, %217 : vector<1x128xi32>
    %219 = vector.broadcast %218 : vector<1x128xi32> to vector<32x128xi32>
    %220 = arith.cmpi sge, %6, %219 : vector<32x128xi32>
    %221 = arith.extui %220 : vector<32x128xi1> to vector<32x128xi32>
    %cst_42 = arith.constant dense<0> : vector<128xi32>
    %222 = vector.multi_reduction <add>, %221, %cst_42 [0] : vector<32x128xi32> to vector<128xi32>
    %223 = vector.shape_cast %222 : vector<128xi32> to vector<1x128xi32>
    %c16_i32_43 = arith.constant 16 : i32
    %224 = vector.broadcast %c16_i32_43 : i32 to vector<1x128xi32>
    %225 = arith.cmpi sge, %223, %224 : vector<1x128xi32>
    %226 = arith.select %225, %218, %216 : vector<1x128xi1>, vector<1x128xi32>
    %c512_i32 = arith.constant 512 : i32
    %227 = vector.broadcast %c512_i32 : i32 to vector<1x128xi32>
    %228 = arith.addi %226, %227 : vector<1x128xi32>
    %229 = vector.broadcast %228 : vector<1x128xi32> to vector<32x128xi32>
    %230 = arith.cmpi sge, %6, %229 : vector<32x128xi32>
    %231 = arith.extui %230 : vector<32x128xi1> to vector<32x128xi32>
    %cst_44 = arith.constant dense<0> : vector<128xi32>
    %232 = vector.multi_reduction <add>, %231, %cst_44 [0] : vector<32x128xi32> to vector<128xi32>
    %233 = vector.shape_cast %232 : vector<128xi32> to vector<1x128xi32>
    %c16_i32_45 = arith.constant 16 : i32
    %234 = vector.broadcast %c16_i32_45 : i32 to vector<1x128xi32>
    %235 = arith.cmpi sge, %233, %234 : vector<1x128xi32>
    %236 = arith.select %235, %228, %226 : vector<1x128xi1>, vector<1x128xi32>
    %c256_i32 = arith.constant 256 : i32
    %237 = vector.broadcast %c256_i32 : i32 to vector<1x128xi32>
    %238 = arith.addi %236, %237 : vector<1x128xi32>
    %239 = vector.broadcast %238 : vector<1x128xi32> to vector<32x128xi32>
    %240 = arith.cmpi sge, %6, %239 : vector<32x128xi32>
    %241 = arith.extui %240 : vector<32x128xi1> to vector<32x128xi32>
    %cst_46 = arith.constant dense<0> : vector<128xi32>
    %242 = vector.multi_reduction <add>, %241, %cst_46 [0] : vector<32x128xi32> to vector<128xi32>
    %243 = vector.shape_cast %242 : vector<128xi32> to vector<1x128xi32>
    %c16_i32_47 = arith.constant 16 : i32
    %244 = vector.broadcast %c16_i32_47 : i32 to vector<1x128xi32>
    %245 = arith.cmpi sge, %243, %244 : vector<1x128xi32>
    %246 = arith.select %245, %238, %236 : vector<1x128xi1>, vector<1x128xi32>
    %c128_i32 = arith.constant 128 : i32
    %247 = vector.broadcast %c128_i32 : i32 to vector<1x128xi32>
    %248 = arith.addi %246, %247 : vector<1x128xi32>
    %249 = vector.broadcast %248 : vector<1x128xi32> to vector<32x128xi32>
    %250 = arith.cmpi sge, %6, %249 : vector<32x128xi32>
    %251 = arith.extui %250 : vector<32x128xi1> to vector<32x128xi32>
    %cst_48 = arith.constant dense<0> : vector<128xi32>
    %252 = vector.multi_reduction <add>, %251, %cst_48 [0] : vector<32x128xi32> to vector<128xi32>
    %253 = vector.shape_cast %252 : vector<128xi32> to vector<1x128xi32>
    %c16_i32_49 = arith.constant 16 : i32
    %254 = vector.broadcast %c16_i32_49 : i32 to vector<1x128xi32>
    %255 = arith.cmpi sge, %253, %254 : vector<1x128xi32>
    %256 = arith.select %255, %248, %246 : vector<1x128xi1>, vector<1x128xi32>
    %c64_i32 = arith.constant 64 : i32
    %257 = vector.broadcast %c64_i32 : i32 to vector<1x128xi32>
    %258 = arith.addi %256, %257 : vector<1x128xi32>
    %259 = vector.broadcast %258 : vector<1x128xi32> to vector<32x128xi32>
    %260 = arith.cmpi sge, %6, %259 : vector<32x128xi32>
    %261 = arith.extui %260 : vector<32x128xi1> to vector<32x128xi32>
    %cst_50 = arith.constant dense<0> : vector<128xi32>
    %262 = vector.multi_reduction <add>, %261, %cst_50 [0] : vector<32x128xi32> to vector<128xi32>
    %263 = vector.shape_cast %262 : vector<128xi32> to vector<1x128xi32>
    %c16_i32_51 = arith.constant 16 : i32
    %264 = vector.broadcast %c16_i32_51 : i32 to vector<1x128xi32>
    %265 = arith.cmpi sge, %263, %264 : vector<1x128xi32>
    %266 = arith.select %265, %258, %256 : vector<1x128xi1>, vector<1x128xi32>
    %c32_i32 = arith.constant 32 : i32
    %267 = vector.broadcast %c32_i32 : i32 to vector<1x128xi32>
    %268 = arith.addi %266, %267 : vector<1x128xi32>
    %269 = vector.broadcast %268 : vector<1x128xi32> to vector<32x128xi32>
    %270 = arith.cmpi sge, %6, %269 : vector<32x128xi32>
    %271 = arith.extui %270 : vector<32x128xi1> to vector<32x128xi32>
    %cst_52 = arith.constant dense<0> : vector<128xi32>
    %272 = vector.multi_reduction <add>, %271, %cst_52 [0] : vector<32x128xi32> to vector<128xi32>
    %273 = vector.shape_cast %272 : vector<128xi32> to vector<1x128xi32>
    %c16_i32_53 = arith.constant 16 : i32
    %274 = vector.broadcast %c16_i32_53 : i32 to vector<1x128xi32>
    %275 = arith.cmpi sge, %273, %274 : vector<1x128xi32>
    %276 = arith.select %275, %268, %266 : vector<1x128xi1>, vector<1x128xi32>
    %c16_i32_54 = arith.constant 16 : i32
    %277 = vector.broadcast %c16_i32_54 : i32 to vector<1x128xi32>
    %278 = arith.addi %276, %277 : vector<1x128xi32>
    %279 = vector.broadcast %278 : vector<1x128xi32> to vector<32x128xi32>
    %280 = arith.cmpi sge, %6, %279 : vector<32x128xi32>
    %281 = arith.extui %280 : vector<32x128xi1> to vector<32x128xi32>
    %cst_55 = arith.constant dense<0> : vector<128xi32>
    %282 = vector.multi_reduction <add>, %281, %cst_55 [0] : vector<32x128xi32> to vector<128xi32>
    %283 = vector.shape_cast %282 : vector<128xi32> to vector<1x128xi32>
    %c16_i32_56 = arith.constant 16 : i32
    %284 = vector.broadcast %c16_i32_56 : i32 to vector<1x128xi32>
    %285 = arith.cmpi sge, %283, %284 : vector<1x128xi32>
    %286 = arith.select %285, %278, %276 : vector<1x128xi1>, vector<1x128xi32>
    %c8_i32 = arith.constant 8 : i32
    %287 = vector.broadcast %c8_i32 : i32 to vector<1x128xi32>
    %288 = arith.addi %286, %287 : vector<1x128xi32>
    %289 = vector.broadcast %288 : vector<1x128xi32> to vector<32x128xi32>
    %290 = arith.cmpi sge, %6, %289 : vector<32x128xi32>
    %291 = arith.extui %290 : vector<32x128xi1> to vector<32x128xi32>
    %cst_57 = arith.constant dense<0> : vector<128xi32>
    %292 = vector.multi_reduction <add>, %291, %cst_57 [0] : vector<32x128xi32> to vector<128xi32>
    %293 = vector.shape_cast %292 : vector<128xi32> to vector<1x128xi32>
    %c16_i32_58 = arith.constant 16 : i32
    %294 = vector.broadcast %c16_i32_58 : i32 to vector<1x128xi32>
    %295 = arith.cmpi sge, %293, %294 : vector<1x128xi32>
    %296 = arith.select %295, %288, %286 : vector<1x128xi1>, vector<1x128xi32>
    %c4_i32 = arith.constant 4 : i32
    %297 = vector.broadcast %c4_i32 : i32 to vector<1x128xi32>
    %298 = arith.addi %296, %297 : vector<1x128xi32>
    %299 = vector.broadcast %298 : vector<1x128xi32> to vector<32x128xi32>
    %300 = arith.cmpi sge, %6, %299 : vector<32x128xi32>
    %301 = arith.extui %300 : vector<32x128xi1> to vector<32x128xi32>
    %cst_59 = arith.constant dense<0> : vector<128xi32>
    %302 = vector.multi_reduction <add>, %301, %cst_59 [0] : vector<32x128xi32> to vector<128xi32>
    %303 = vector.shape_cast %302 : vector<128xi32> to vector<1x128xi32>
    %c16_i32_60 = arith.constant 16 : i32
    %304 = vector.broadcast %c16_i32_60 : i32 to vector<1x128xi32>
    %305 = arith.cmpi sge, %303, %304 : vector<1x128xi32>
    %306 = arith.select %305, %298, %296 : vector<1x128xi1>, vector<1x128xi32>
    %c2_i32 = arith.constant 2 : i32
    %307 = vector.broadcast %c2_i32 : i32 to vector<1x128xi32>
    %308 = arith.addi %306, %307 : vector<1x128xi32>
    %309 = vector.broadcast %308 : vector<1x128xi32> to vector<32x128xi32>
    %310 = arith.cmpi sge, %6, %309 : vector<32x128xi32>
    %311 = arith.extui %310 : vector<32x128xi1> to vector<32x128xi32>
    %cst_61 = arith.constant dense<0> : vector<128xi32>
    %312 = vector.multi_reduction <add>, %311, %cst_61 [0] : vector<32x128xi32> to vector<128xi32>
    %313 = vector.shape_cast %312 : vector<128xi32> to vector<1x128xi32>
    %c16_i32_62 = arith.constant 16 : i32
    %314 = vector.broadcast %c16_i32_62 : i32 to vector<1x128xi32>
    %315 = arith.cmpi sge, %313, %314 : vector<1x128xi32>
    %316 = arith.select %315, %308, %306 : vector<1x128xi1>, vector<1x128xi32>
    %c1_i32 = arith.constant 1 : i32
    %317 = vector.broadcast %c1_i32 : i32 to vector<1x128xi32>
    %318 = arith.addi %316, %317 : vector<1x128xi32>
    %319 = vector.broadcast %318 : vector<1x128xi32> to vector<32x128xi32>
    %320 = arith.cmpi sge, %6, %319 : vector<32x128xi32>
    %321 = arith.extui %320 : vector<32x128xi1> to vector<32x128xi32>
    %cst_63 = arith.constant dense<0> : vector<128xi32>
    %322 = vector.multi_reduction <add>, %321, %cst_63 [0] : vector<32x128xi32> to vector<128xi32>
    %323 = vector.shape_cast %322 : vector<128xi32> to vector<1x128xi32>
    %c16_i32_64 = arith.constant 16 : i32
    %324 = vector.broadcast %c16_i32_64 : i32 to vector<1x128xi32>
    %325 = arith.cmpi sge, %323, %324 : vector<1x128xi32>
    %326 = arith.select %325, %318, %316 : vector<1x128xi1>, vector<1x128xi32>
    %327 = vector.broadcast %326 : vector<1x128xi32> to vector<32x128xi32>
    %328 = arith.cmpi sge, %6, %327 : vector<32x128xi32>
    %cst_65 = arith.constant 0.000000e+00 : f32
    %329 = vector.broadcast %cst_65 : f32 to vector<32x128xf32>
    %330 = arith.select %328, %0, %329 : vector<32x128xi1>, vector<32x128xf32>
    %c0_66 = arith.constant 0 : index
    %c0_67 = arith.constant 0 : index
    %331 = vector.load %arg2[%c0_66, %c0_67] : memref<32x128xf32, #tpu.memory_space<vmem>>, vector<32x128xf32>
    tpu.vector_store %arg2[%c0_66, %c0_67], %330 {strides = array<i32>} : memref<32x128xf32, #tpu.memory_space<vmem>>, vector<32x128xf32>,
    return
  }
  func.func @transform_0(%arg0: i32) -> (i32, i32) {
    %c0_i32 = arith.constant 0 : i32
    %c0_i32_0 = arith.constant 0 : i32
    return %c0_i32, %arg0 : i32, i32
  }
  func.func @transform_1(%arg0: i32) -> (i32, i32) {
    %c0_i32 = arith.constant 0 : i32
    %c0_i32_0 = arith.constant 0 : i32
    return %c0_i32, %arg0 : i32, i32
  }
}

</mosaic_0001>

<llo_original>
// kernel: tpu_custom_call.1
$region0: #{tpu_custom_call.1}
  #allocation0 [shape = 'u32[]', space=smem, size = 0x4, offset = 0x4, fixed_abs, tag = 'smem constant byte address 0x4 - core index']
  #allocation1 [shape = 'u32[144,128]{1,0:T(1,128)}', space=vmem, size = 0x12000, scoped, tag = 'internal scratch']
  %s0 = inlined_call_operand.hbm [shape: f32[32,128], index: 0, kind: input, shape index: {}]
  %s1 = inlined_call_operand.hbm [shape: f32[32,128], index: 1, kind: output, shape index: {}]
  %s2 = sld [smem:[#allocation0]]
  $region18: #{tpu_custom_call.1} parent=0
    _
  %s4 = ssub.s32 1, %s2
  %s5 = scalar_select 0, %s4, %s2
  $region1: #{tpu_custom_call.1} parent=0
    #allocation2 [shape = 'u8[16384]{0}', space=vmem, size = 0x4000, scoped, tag = 'input window, operand 0, single buffered']
    #allocation3 [shape = 's32[1]{0}', space=sflag, size = 0x4, scoped, tag = 'scoped memory for tpu_custom_call.1']
    #allocation4 [shape = 's32[1]{0}', space=sflag, size = 0x4, scoped, tag = 'scoped memory for tpu_custom_call.1']
    #allocation5 [shape = 'u8[16384]{0}', space=vmem, size = 0x4000, scoped, tag = 'output window, operand 0, single buffered']
    %6 = vsyncpa [#allocation3], 0
    %7 = vsyncpa [#allocation4], 0
    // Predicated region
    $region2: #{tpu_custom_call.1} parent=1 // pred_check
      _
    $region3: #{tpu_custom_call.1} parent=1 // pred_check_branch
      %9 = sbr.rel (0) target = $region5
    $region4: #{tpu_custom_call.1} parent=1 // pred_region
      %s11 = ssub.s32 512, 512
      %12 = vsyncadd [#allocation3], %s11
      %s13 = sshll.u32 [#allocation2], 4
      %s14 = int_to_ptr.vmem [resolvable:$true] %s13
      %19 = dma.hbm_to_vmem [thread:$0]  %s0, 512, %s14, [#allocation3], 128, 128, 8
    $region5: #{tpu_custom_call.1} parent=1 // pred_fallthru
      _
    // Predicated region
    $region6: #{tpu_custom_call.1} parent=1 // pred_check
      _
    $region7: #{tpu_custom_call.1} parent=1 // pred_check_branch
      %21 = sbr.rel (0) target = $region9
    $region8: #{tpu_custom_call.1} parent=1 // pred_region
      %22 = dma.done [#allocation3], 512
    $region9: #{tpu_custom_call.1} parent=1 // pred_fallthru
      _
    %v23 = vld [vmem:[#allocation2] sm:$0xff]
    %v24 = vld [vmem:[#allocation2 + $0x8] sm:$0xff]
    %v25 = vld [vmem:[#allocation2 + $0x10] sm:$0xff]
    %v26 = vld [vmem:[#allocation2 + $0x18] sm:$0xff]
    %vm31 = vcmp.lt.s32.totalorder %v23, 0
    %vm32 = vcmp.lt.s32.totalorder %v24, 0
    %vm33 = vcmp.lt.s32.totalorder %v25, 0
    %vm34 = vcmp.lt.s32.totalorder %v26, 0
    %v35 = vxor.u32 %v23, 2147483647
    %v36 = vxor.u32 %v24, 2147483647
    %v37 = vxor.u32 %v25, 2147483647
    %v38 = vxor.u32 %v26, 2147483647
    %v39 = vsel %vm31, %v35, %v23
    %v40 = vsel %vm32, %v36, %v24
    %v41 = vsel %vm33, %v37, %v25
    %v42 = vsel %vm34, %v38, %v26
    %vm43 = vcmp.ge.s32.totalorder %v39, 0
    %vm44 = vcmp.ge.s32.totalorder %v40, 0
    %vm45 = vcmp.ge.s32.totalorder %v41, 0
    %vm46 = vcmp.ge.s32.totalorder %v42, 0
    %v47 = vsel %vm43, 1, 0
    %v48 = vsel %vm44, 1, 0
    %v49 = vsel %vm45, 1, 0
    %v50 = vsel %vm46, 1, 0
    %v51 = vadd.s32 %v47, %v48
    %v52 = vadd.s32 %v49, %v50
    %v53 = vadd.s32 %v51, %v52
    %v54 = vrot.slane %v53, 4
    %v55 = vadd.s32 %v53, %v54
    %v56 = vrot.slane %v55, 2
    %v57 = vadd.s32 %v55, %v56
    %v58 = vrot.slane %v57, 1
    %v59 = vadd.s32 %v57, %v58
    %vm60 = vcmp.ge.s32.totalorder %v59, 16
    %v61 = vsel %vm60, 0, 2147483648
    %v62 = vadd.s32 %v61, 1073741824
    %vm63 = vcmp.ge.s32.totalorder %v39, %v62
    %vm64 = vcmp.ge.s32.totalorder %v40, %v62
    %vm65 = vcmp.ge.s32.totalorder %v41, %v62
    %vm66 = vcmp.ge.s32.totalorder %v42, %v62
    %v67 = vsel %vm63, 1, 0
    %v68 = vsel %vm64, 1, 0
    %v69 = vsel %vm65, 1, 0
    %v70 = vsel %vm66, 1, 0
    %v71 = vadd.s32 %v67, %v68
    %v72 = vadd.s32 %v69, %v70
    %v73 = vadd.s32 %v71, %v72
    %v74 = vrot.slane %v73, 4
    %v75 = vadd.s32 %v73, %v74
    %v76 = vrot.slane %v75, 2
    %v77 = vadd.s32 %v75, %v76
    %v78 = vrot.slane %v77, 1
    %v79 = vadd.s32 %v77, %v78
    %vm80 = vcmp.ge.s32.totalorder %v79, 16
    %v81 = vsel %vm80, %v62, %v61
    %v82 = vadd.s32 %v81, 536870912
    %vm83 = vcmp.ge.s32.totalorder %v39, %v82
    %vm84 = vcmp.ge.s32.totalorder %v40, %v82
    %vm85 = vcmp.ge.s32.totalorder %v41, %v82
    %vm86 = vcmp.ge.s32.totalorder %v42, %v82
    %v87 = vsel %vm83, 1, 0
    %v88 = vsel %vm84, 1, 0
    %v89 = vsel %vm85, 1, 0
    %v90 = vsel %vm86, 1, 0
    %v91 = vadd.s32 %v87, %v88
    %v92 = vadd.s32 %v89, %v90
    %v93 = vadd.s32 %v91, %v92
    %v94 = vrot.slane %v93, 4
    %v95 = vadd.s32 %v93, %v94
    %v96 = vrot.slane %v95, 2
    %v97 = vadd.s32 %v95, %v96
    %v98 = vrot.slane %v97, 1
    %v99 = vadd.s32 %v97, %v98
    %vm100 = vcmp.ge.s32.totalorder %v99, 16
    %v101 = vsel %vm100, %v82, %v81
    %v102 = vadd.s32 %v101, 268435456
    %vm103 = vcmp.ge.s32.totalorder %v39, %v102
    %vm104 = vcmp.ge.s32.totalorder %v40, %v102
    %vm105 = vcmp.ge.s32.totalorder %v41, %v102
    %vm106 = vcmp.ge.s32.totalorder %v42, %v102
    %v107 = vsel %vm103, 1, 0
    %v108 = vsel %vm104, 1, 0
    %v109 = vsel %vm105, 1, 0
    %v110 = vsel %vm106, 1, 0
    %v111 = vadd.s32 %v107, %v108
    %v112 = vadd.s32 %v109, %v110
    %v113 = vadd.s32 %v111, %v112
    %v114 = vrot.slane %v113, 4
    %v115 = vadd.s32 %v113, %v114
    %v116 = vrot.slane %v115, 2
    %v117 = vadd.s32 %v115, %v116
    %v118 = vrot.slane %v117, 1
    %v119 = vadd.s32 %v117, %v118
    %vm120 = vcmp.ge.s32.totalorder %v119, 16
    %v121 = vsel %vm120, %v102, %v101
    %v122 = vadd.s32 %v121, 134217728
    %vm123 = vcmp.ge.s32.totalorder %v39, %v122
    %vm124 = vcmp.ge.s32.totalorder %v40, %v122
    %vm125 = vcmp.ge.s32.totalorder %v41, %v122
    %vm126 = vcmp.ge.s32.totalorder %v42, %v122
    %v127 = vsel %vm123, 1, 0
    %v128 = vsel %vm124, 1, 0
    %v129 = vsel %vm125, 1, 0
    %v130 = vsel %vm126, 1, 0
    %v131 = vadd.s32 %v127, %v128
    %v132 = vadd.s32 %v129, %v130
    %v133 = vadd.s32 %v131, %v132
    %v134 = vrot.slane %v133, 4
    %v135 = vadd.s32 %v133, %v134
    %v136 = vrot.slane %v135, 2
    %v137 = vadd.s32 %v135, %v136
    %v138 = vrot.slane %v137, 1
    %v139 = vadd.s32 %v137, %v138
    %vm140 = vcmp.ge.s32.totalorder %v139, 16
    %v141 = vsel %vm140, %v122, %v121
    %v142 = vadd.s32 %v141, 67108864
    %vm143 = vcmp.ge.s32.totalorder %v39, %v142
    %vm144 = vcmp.ge.s32.totalorder %v40, %v142
    %vm145 = vcmp.ge.s32.totalorder %v41, %v142
    %vm146 = vcmp.ge.s32.totalorder %v42, %v142
    %v147 = vsel %vm143, 1, 0
    %v148 = vsel %vm144, 1, 0
    %v149 = vsel %vm145, 1, 0
    %v150 = vsel %vm146, 1, 0
    %v151 = vadd.s32 %v147, %v148
    %v152 = vadd.s32 %v149, %v150
    %v153 = vadd.s32 %v151, %v152
    %v154 = vrot.slane %v153, 4
    %v155 = vadd.s32 %v153, %v154
    %v156 = vrot.slane %v155, 2
    %v157 = vadd.s32 %v155, %v156
    %v158 = vrot.slane %v157, 1
    %v159 = vadd.s32 %v157, %v158
    %vm160 = vcmp.ge.s32.totalorder %v159, 16
    %v161 = vsel %vm160, %v142, %v141
    %v162 = vadd.s32 %v161, 33554432
    %vm163 = vcmp.ge.s32.totalorder %v39, %v162
    %vm164 = vcmp.ge.s32.totalorder %v40, %v162
    %vm165 = vcmp.ge.s32.totalorder %v41, %v162
    %vm166 = vcmp.ge.s32.totalorder %v42, %v162
    %v167 = vsel %vm163, 1, 0
    %v168 = vsel %vm164, 1, 0
    %v169 = vsel %vm165, 1, 0
    %v170 = vsel %vm166, 1, 0
    %v171 = vadd.s32 %v167, %v168
    %v172 = vadd.s32 %v169, %v170
    %v173 = vadd.s32 %v171, %v172
    %v174 = vrot.slane %v173, 4
    %v175 = vadd.s32 %v173, %v174
    %v176 = vrot.slane %v175, 2
    %v177 = vadd.s32 %v175, %v176
    %v178 = vrot.slane %v177, 1
    %v179 = vadd.s32 %v177, %v178
    %vm180 = vcmp.ge.s32.totalorder %v179, 16
    %v181 = vsel %vm180, %v162, %v161
    %v182 = vadd.s32 %v181, 16777216
    %vm183 = vcmp.ge.s32.totalorder %v39, %v182
    %vm184 = vcmp.ge.s32.totalorder %v40, %v182
    %vm185 = vcmp.ge.s32.totalorder %v41, %v182
    %vm186 = vcmp.ge.s32.totalorder %v42, %v182
    %v187 = vsel %vm183, 1, 0
    %v188 = vsel %vm184, 1, 0
    %v189 = vsel %vm185, 1, 0
    %v190 = vsel %vm186, 1, 0
    %v191 = vadd.s32 %v187, %v188
    %v192 = vadd.s32 %v189, %v190
    %v193 = vadd.s32 %v191, %v192
    %v194 = vrot.slane %v193, 4
    %v195 = vadd.s32 %v193, %v194
    %v196 = vrot.slane %v195, 2
    %v197 = vadd.s32 %v195, %v196
    %v198 = vrot.slane %v197, 1
    %v199 = vadd.s32 %v197, %v198
    %vm200 = vcmp.ge.s32.totalorder %v199, 16
    %v201 = vsel %vm200, %v182, %v181
    %v202 = vadd.s32 %v201, 8388608
    %vm203 = vcmp.ge.s32.totalorder %v39, %v202
    %vm204 = vcmp.ge.s32.totalorder %v40, %v202
    %vm205 = vcmp.ge.s32.totalorder %v41, %v202
    %vm206 = vcmp.ge.s32.totalorder %v42, %v202
    %v207 = vsel %vm203, 1, 0
    %v208 = vsel %vm204, 1, 0
    %v209 = vsel %vm205, 1, 0
    %v210 = vsel %vm206, 1, 0
    %v211 = vadd.s32 %v207, %v208
    %v212 = vadd.s32 %v209, %v210
    %v213 = vadd.s32 %v211, %v212
    %v214 = vrot.slane %v213, 4
    %v215 = vadd.s32 %v213, %v214
    %v216 = vrot.slane %v215, 2
    %v217 = vadd.s32 %v215, %v216
    %v218 = vrot.slane %v217, 1
    %v219 = vadd.s32 %v217, %v218
    %vm220 = vcmp.ge.s32.totalorder %v219, 16
    %v221 = vsel %vm220, %v202, %v201
    %v222 = vadd.s32 %v221, 4194304
    %vm223 = vcmp.ge.s32.totalorder %v39, %v222
    %vm224 = vcmp.ge.s32.totalorder %v40, %v222
    %vm225 = vcmp.ge.s32.totalorder %v41, %v222
    %vm226 = vcmp.ge.s32.totalorder %v42, %v222
    %v227 = vsel %vm223, 1, 0
    %v228 = vsel %vm224, 1, 0
    %v229 = vsel %vm225, 1, 0
    %v230 = vsel %vm226, 1, 0
    %v231 = vadd.s32 %v227, %v228
    %v232 = vadd.s32 %v229, %v230
    %v233 = vadd.s32 %v231, %v232
    %v234 = vrot.slane %v233, 4
    %v235 = vadd.s32 %v233, %v234
    %v236 = vrot.slane %v235, 2
    %v237 = vadd.s32 %v235, %v236
    %v238 = vrot.slane %v237, 1
    %v239 = vadd.s32 %v237, %v238
    %vm240 = vcmp.ge.s32.totalorder %v239, 16
    %v241 = vsel %vm240, %v222, %v221
    %v242 = vadd.s32 %v241, 2097152
    %vm243 = vcmp.ge.s32.totalorder %v39, %v242
    %vm244 = vcmp.ge.s32.totalorder %v40, %v242
    %vm245 = vcmp.ge.s32.totalorder %v41, %v242
    %vm246 = vcmp.ge.s32.totalorder %v42, %v242
    %v247 = vsel %vm243, 1, 0
    %v248 = vsel %vm244, 1, 0
    %v249 = vsel %vm245, 1, 0
    %v250 = vsel %vm246, 1, 0
    %v251 = vadd.s32 %v247, %v248
    %v252 = vadd.s32 %v249, %v250
    %v253 = vadd.s32 %v251, %v252
    %v254 = vrot.slane %v253, 4
    %v255 = vadd.s32 %v253, %v254
    %v256 = vrot.slane %v255, 2
    %v257 = vadd.s32 %v255, %v256
    %v258 = vrot.slane %v257, 1
    %v259 = vadd.s32 %v257, %v258
    %vm260 = vcmp.ge.s32.totalorder %v259, 16
    %v261 = vsel %vm260, %v242, %v241
    %v262 = vadd.s32 %v261, 1048576
    %vm263 = vcmp.ge.s32.totalorder %v39, %v262
    %vm264 = vcmp.ge.s32.totalorder %v40, %v262
    %vm265 = vcmp.ge.s32.totalorder %v41, %v262
    %vm266 = vcmp.ge.s32.totalorder %v42, %v262
    %v267 = vsel %vm263, 1, 0
    %v268 = vsel %vm264, 1, 0
    %v269 = vsel %vm265, 1, 0
    %v270 = vsel %vm266, 1, 0
    %v271 = vadd.s32 %v267, %v268
    %v272 = vadd.s32 %v269, %v270
    %v273 = vadd.s32 %v271, %v272
    %v274 = vrot.slane %v273, 4
    %v275 = vadd.s32 %v273, %v274
    %v276 = vrot.slane %v275, 2
    %v277 = vadd.s32 %v275, %v276
    %v278 = vrot.slane %v277, 1
    %v279 = vadd.s32 %v277, %v278
    %vm280 = vcmp.ge.s32.totalorder %v279, 16
    %v281 = vsel %vm280, %v262, %v261
    %v282 = vadd.s32 %v281, 524288
    %vm283 = vcmp.ge.s32.totalorder %v39, %v282
    %vm284 = vcmp.ge.s32.totalorder %v40, %v282
    %vm285 = vcmp.ge.s32.totalorder %v41, %v282
    %vm286 = vcmp.ge.s32.totalorder %v42, %v282
    %v287 = vsel %vm283, 1, 0
    %v288 = vsel %vm284, 1, 0
    %v289 = vsel %vm285, 1, 0
    %v290 = vsel %vm286, 1, 0
    %v291 = vadd.s32 %v287, %v288
    %v292 = vadd.s32 %v289, %v290
    %v293 = vadd.s32 %v291, %v292
    %v294 = vrot.slane %v293, 4
    %v295 = vadd.s32 %v293, %v294
    %v296 = vrot.slane %v295, 2
    %v297 = vadd.s32 %v295, %v296
    %v298 = vrot.slane %v297, 1
    %v299 = vadd.s32 %v297, %v298
    %vm300 = vcmp.ge.s32.totalorder %v299, 16
    %v301 = vsel %vm300, %v282, %v281
    %v302 = vadd.s32 %v301, 262144
    %vm303 = vcmp.ge.s32.totalorder %v39, %v302
    %vm304 = vcmp.ge.s32.totalorder %v40, %v302
    %vm305 = vcmp.ge.s32.totalorder %v41, %v302
    %vm306 = vcmp.ge.s32.totalorder %v42, %v302
    %v307 = vsel %vm303, 1, 0
    %v308 = vsel %vm304, 1, 0
    %v309 = vsel %vm305, 1, 0
    %v310 = vsel %vm306, 1, 0
    %v311 = vadd.s32 %v307, %v308
    %v312 = vadd.s32 %v309, %v310
    %v313 = vadd.s32 %v311, %v312
    %v314 = vrot.slane %v313, 4
    %v315 = vadd.s32 %v313, %v314
    %v316 = vrot.slane %v315, 2
    %v317 = vadd.s32 %v315, %v316
    %v318 = vrot.slane %v317, 1
    %v319 = vadd.s32 %v317, %v318
    %vm320 = vcmp.ge.s32.totalorder %v319, 16
    %v321 = vsel %vm320, %v302, %v301
    %v322 = vadd.s32 %v321, 131072
    %vm323 = vcmp.ge.s32.totalorder %v39, %v322
    %vm324 = vcmp.ge.s32.totalorder %v40, %v322
    %vm325 = vcmp.ge.s32.totalorder %v41, %v322
    %vm326 = vcmp.ge.s32.totalorder %v42, %v322
    %v327 = vsel %vm323, 1, 0
    %v328 = vsel %vm324, 1, 0
    %v329 = vsel %vm325, 1, 0
    %v330 = vsel %vm326, 1, 0
    %v331 = vadd.s32 %v327, %v328
    %v332 = vadd.s32 %v329, %v330
    %v333 = vadd.s32 %v331, %v332
    %v334 = vrot.slane %v333, 4
    %v335 = vadd.s32 %v333, %v334
    %v336 = vrot.slane %v335, 2
    %v337 = vadd.s32 %v335, %v336
    %v338 = vrot.slane %v337, 1
    %v339 = vadd.s32 %v337, %v338
    %vm340 = vcmp.ge.s32.totalorder %v339, 16
    %v341 = vsel %vm340, %v322, %v321
    %v342 = vadd.s32 %v341, 65536
    %vm343 = vcmp.ge.s32.totalorder %v39, %v342
    %vm344 = vcmp.ge.s32.totalorder %v40, %v342
    %vm345 = vcmp.ge.s32.totalorder %v41, %v342
    %vm346 = vcmp.ge.s32.totalorder %v42, %v342
    %v347 = vsel %vm343, 1, 0
    %v348 = vsel %vm344, 1, 0
    %v349 = vsel %vm345, 1, 0
    %v350 = vsel %vm346, 1, 0
    %v351 = vadd.s32 %v347, %v348
    %v352 = vadd.s32 %v349, %v350
    %v353 = vadd.s32 %v351, %v352
    %v354 = vrot.slane %v353, 4
    %v355 = vadd.s32 %v353, %v354
    %v356 = vrot.slane %v355, 2
    %v357 = vadd.s32 %v355, %v356
    %v358 = vrot.slane %v357, 1
    %v359 = vadd.s32 %v357, %v358
    %vm360 = vcmp.ge.s32.totalorder %v359, 16
    %v361 = vsel %vm360, %v342, %v341
    %v362 = vadd.s32 %v361, 32768
    %vm363 = vcmp.ge.s32.totalorder %v39, %v362
    %vm364 = vcmp.ge.s32.totalorder %v40, %v362
    %vm365 = vcmp.ge.s32.totalorder %v41, %v362
    %vm366 = vcmp.ge.s32.totalorder %v42, %v362
    %v367 = vsel %vm363, 1, 0
    %v368 = vsel %vm364, 1, 0
    %v369 = vsel %vm365, 1, 0
    %v370 = vsel %vm366, 1, 0
    %v371 = vadd.s32 %v367, %v368
    %v372 = vadd.s32 %v369, %v370
    %v373 = vadd.s32 %v371, %v372
    %v374 = vrot.slane %v373, 4
    %v375 = vadd.s32 %v373, %v374
    %v376 = vrot.slane %v375, 2
    %v377 = vadd.s32 %v375, %v376
    %v378 = vrot.slane %v377, 1
    %v379 = vadd.s32 %v377, %v378
    %vm380 = vcmp.ge.s32.totalorder %v379, 16
    %v381 = vsel %vm380, %v362, %v361
    %v382 = vadd.s32 %v381, 16384
    %vm383 = vcmp.ge.s32.totalorder %v39, %v382
    %vm384 = vcmp.ge.s32.totalorder %v40, %v382
    %vm385 = vcmp.ge.s32.totalorder %v41, %v382
    %vm386 = vcmp.ge.s32.totalorder %v42, %v382
    %v387 = vsel %vm383, 1, 0
    %v388 = vsel %vm384, 1, 0
    %v389 = vsel %vm385, 1, 0
    %v390 = vsel %vm386, 1, 0
    %v391 = vadd.s32 %v387, %v388
    %v392 = vadd.s32 %v389, %v390
    %v393 = vadd.s32 %v391, %v392
    %v394 = vrot.slane %v393, 4
    %v395 = vadd.s32 %v393, %v394
    %v396 = vrot.slane %v395, 2
    %v397 = vadd.s32 %v395, %v396
    %v398 = vrot.slane %v397, 1
    %v399 = vadd.s32 %v397, %v398
    %vm400 = vcmp.ge.s32.totalorder %v399, 16
    %v401 = vsel %vm400, %v382, %v381
    %v402 = vadd.s32 %v401, 8192
    %vm403 = vcmp.ge.s32.totalorder %v39, %v402
    %vm404 = vcmp.ge.s32.totalorder %v40, %v402
    %vm405 = vcmp.ge.s32.totalorder %v41, %v402
    %vm406 = vcmp.ge.s32.totalorder %v42, %v402
    %v407 = vsel %vm403, 1, 0
    %v408 = vsel %vm404, 1, 0
    %v409 = vsel %vm405, 1, 0
    %v410 = vsel %vm406, 1, 0
    %v411 = vadd.s32 %v407, %v408
    %v412 = vadd.s32 %v409, %v410
    %v413 = vadd.s32 %v411, %v412
    %v414 = vrot.slane %v413, 4
    %v415 = vadd.s32 %v413, %v414
    %v416 = vrot.slane %v415, 2
    %v417 = vadd.s32 %v415, %v416
    %v418 = vrot.slane %v417, 1
    %v419 = vadd.s32 %v417, %v418
    %vm420 = vcmp.ge.s32.totalorder %v419, 16
    %v421 = vsel %vm420, %v402, %v401
    %v422 = vadd.s32 %v421, 4096
    %vm423 = vcmp.ge.s32.totalorder %v39, %v422
    %vm424 = vcmp.ge.s32.totalorder %v40, %v422
    %vm425 = vcmp.ge.s32.totalorder %v41, %v422
    %vm426 = vcmp.ge.s32.totalorder %v42, %v422
    %v427 = vsel %vm423, 1, 0
    %v428 = vsel %vm424, 1, 0
    %v429 = vsel %vm425, 1, 0
    %v430 = vsel %vm426, 1, 0
    %v431 = vadd.s32 %v427, %v428
    %v432 = vadd.s32 %v429, %v430
    %v433 = vadd.s32 %v431, %v432
    %v434 = vrot.slane %v433, 4
    %v435 = vadd.s32 %v433, %v434
    %v436 = vrot.slane %v435, 2
    %v437 = vadd.s32 %v435, %v436
    %v438 = vrot.slane %v437, 1
    %v439 = vadd.s32 %v437, %v438
    %vm440 = vcmp.ge.s32.totalorder %v439, 16
    %v441 = vsel %vm440, %v422, %v421
    %v442 = vadd.s32 %v441, 2048
    %vm443 = vcmp.ge.s32.totalorder %v39, %v442
    %vm444 = vcmp.ge.s32.totalorder %v40, %v442
    %vm445 = vcmp.ge.s32.totalorder %v41, %v442
    %vm446 = vcmp.ge.s32.totalorder %v42, %v442
    %v447 = vsel %vm443, 1, 0
    %v448 = vsel %vm444, 1, 0
    %v449 = vsel %vm445, 1, 0
    %v450 = vsel %vm446, 1, 0
    %v451 = vadd.s32 %v447, %v448
    %v452 = vadd.s32 %v449, %v450
    %v453 = vadd.s32 %v451, %v452
    %v454 = vrot.slane %v453, 4
    %v455 = vadd.s32 %v453, %v454
    %v456 = vrot.slane %v455, 2
    %v457 = vadd.s32 %v455, %v456
    %v458 = vrot.slane %v457, 1
    %v459 = vadd.s32 %v457, %v458
    %vm460 = vcmp.ge.s32.totalorder %v459, 16
    %v461 = vsel %vm460, %v442, %v441
    %v462 = vadd.s32 %v461, 1024
    %vm463 = vcmp.ge.s32.totalorder %v39, %v462
    %vm464 = vcmp.ge.s32.totalorder %v40, %v462
    %vm465 = vcmp.ge.s32.totalorder %v41, %v462
    %vm466 = vcmp.ge.s32.totalorder %v42, %v462
    %v467 = vsel %vm463, 1, 0
    %v468 = vsel %vm464, 1, 0
    %v469 = vsel %vm465, 1, 0
    %v470 = vsel %vm466, 1, 0
    %v471 = vadd.s32 %v467, %v468
    %v472 = vadd.s32 %v469, %v470
    %v473 = vadd.s32 %v471, %v472
    %v474 = vrot.slane %v473, 4
    %v475 = vadd.s32 %v473, %v474
    %v476 = vrot.slane %v475, 2
    %v477 = vadd.s32 %v475, %v476
    %v478 = vrot.slane %v477, 1
    %v479 = vadd.s32 %v477, %v478
    %vm480 = vcmp.ge.s32.totalorder %v479, 16
    %v481 = vsel %vm480, %v462, %v461
    %v482 = vadd.s32 %v481, 512
    %vm483 = vcmp.ge.s32.totalorder %v39, %v482
    %vm484 = vcmp.ge.s32.totalorder %v40, %v482
    %vm485 = vcmp.ge.s32.totalorder %v41, %v482
    %vm486 = vcmp.ge.s32.totalorder %v42, %v482
    %v487 = vsel %vm483, 1, 0
    %v488 = vsel %vm484, 1, 0
    %v489 = vsel %vm485, 1, 0
    %v490 = vsel %vm486, 1, 0
    %v491 = vadd.s32 %v487, %v488
    %v492 = vadd.s32 %v489, %v490
    %v493 = vadd.s32 %v491, %v492
    %v494 = vrot.slane %v493, 4
    %v495 = vadd.s32 %v493, %v494
    %v496 = vrot.slane %v495, 2
    %v497 = vadd.s32 %v495, %v496
    %v498 = vrot.slane %v497, 1
    %v499 = vadd.s32 %v497, %v498
    %vm500 = vcmp.ge.s32.totalorder %v499, 16
    %v501 = vsel %vm500, %v482, %v481
    %v502 = vadd.s32 %v501, 256
    %vm503 = vcmp.ge.s32.totalorder %v39, %v502
    %vm504 = vcmp.ge.s32.totalorder %v40, %v502
    %vm505 = vcmp.ge.s32.totalorder %v41, %v502
    %vm506 = vcmp.ge.s32.totalorder %v42, %v502
    %v507 = vsel %vm503, 1, 0
    %v508 = vsel %vm504, 1, 0
    %v509 = vsel %vm505, 1, 0
    %v510 = vsel %vm506, 1, 0
    %v511 = vadd.s32 %v507, %v508
    %v512 = vadd.s32 %v509, %v510
    %v513 = vadd.s32 %v511, %v512
    %v514 = vrot.slane %v513, 4
    %v515 = vadd.s32 %v513, %v514
    %v516 = vrot.slane %v515, 2
    %v517 = vadd.s32 %v515, %v516
    %v518 = vrot.slane %v517, 1
    %v519 = vadd.s32 %v517, %v518
    %vm520 = vcmp.ge.s32.totalorder %v519, 16
    %v521 = vsel %vm520, %v502, %v501
    %v522 = vadd.s32 %v521, 128
    %vm523 = vcmp.ge.s32.totalorder %v39, %v522
    %vm524 = vcmp.ge.s32.totalorder %v40, %v522
    %vm525 = vcmp.ge.s32.totalorder %v41, %v522
    %vm526 = vcmp.ge.s32.totalorder %v42, %v522
    %v527 = vsel %vm523, 1, 0
    %v528 = vsel %vm524, 1, 0
    %v529 = vsel %vm525, 1, 0
    %v530 = vsel %vm526, 1, 0
    %v531 = vadd.s32 %v527, %v528
    %v532 = vadd.s32 %v529, %v530
    %v533 = vadd.s32 %v531, %v532
    %v534 = vrot.slane %v533, 4
    %v535 = vadd.s32 %v533, %v534
    %v536 = vrot.slane %v535, 2
    %v537 = vadd.s32 %v535, %v536
    %v538 = vrot.slane %v537, 1
    %v539 = vadd.s32 %v537, %v538
    %vm540 = vcmp.ge.s32.totalorder %v539, 16
    %v541 = vsel %vm540, %v522, %v521
    %v542 = vadd.s32 %v541, 64
    %vm543 = vcmp.ge.s32.totalorder %v39, %v542
    %vm544 = vcmp.ge.s32.totalorder %v40, %v542
    %vm545 = vcmp.ge.s32.totalorder %v41, %v542
    %vm546 = vcmp.ge.s32.totalorder %v42, %v542
    %v547 = vsel %vm543, 1, 0
    %v548 = vsel %vm544, 1, 0
    %v549 = vsel %vm545, 1, 0
    %v550 = vsel %vm546, 1, 0
    %v551 = vadd.s32 %v547, %v548
    %v552 = vadd.s32 %v549, %v550
    %v553 = vadd.s32 %v551, %v552
    %v554 = vrot.slane %v553, 4
    %v555 = vadd.s32 %v553, %v554
    %v556 = vrot.slane %v555, 2
    %v557 = vadd.s32 %v555, %v556
    %v558 = vrot.slane %v557, 1
    %v559 = vadd.s32 %v557, %v558
    %vm560 = vcmp.ge.s32.totalorder %v559, 16
    %v561 = vsel %vm560, %v542, %v541
    %v562 = vadd.s32 %v561, 32
    %vm563 = vcmp.ge.s32.totalorder %v39, %v562
    %vm564 = vcmp.ge.s32.totalorder %v40, %v562
    %vm565 = vcmp.ge.s32.totalorder %v41, %v562
    %vm566 = vcmp.ge.s32.totalorder %v42, %v562
    %v567 = vsel %vm563, 1, 0
    %v568 = vsel %vm564, 1, 0
    %v569 = vsel %vm565, 1, 0
    %v570 = vsel %vm566, 1, 0
    %v571 = vadd.s32 %v567, %v568
    %v572 = vadd.s32 %v569, %v570
    %v573 = vadd.s32 %v571, %v572
    %v574 = vrot.slane %v573, 4
    %v575 = vadd.s32 %v573, %v574
    %v576 = vrot.slane %v575, 2
    %v577 = vadd.s32 %v575, %v576
    %v578 = vrot.slane %v577, 1
    %v579 = vadd.s32 %v577, %v578
    %vm580 = vcmp.ge.s32.totalorder %v579, 16
    %v581 = vsel %vm580, %v562, %v561
    %v582 = vadd.s32 %v581, 16
    %vm583 = vcmp.ge.s32.totalorder %v39, %v582
    %vm584 = vcmp.ge.s32.totalorder %v40, %v582
    %vm585 = vcmp.ge.s32.totalorder %v41, %v582
    %vm586 = vcmp.ge.s32.totalorder %v42, %v582
    %v587 = vsel %vm583, 1, 0
    %v588 = vsel %vm584, 1, 0
    %v589 = vsel %vm585, 1, 0
    %v590 = vsel %vm586, 1, 0
    %v591 = vadd.s32 %v587, %v588
    %v592 = vadd.s32 %v589, %v590
    %v593 = vadd.s32 %v591, %v592
    %v594 = vrot.slane %v593, 4
    %v595 = vadd.s32 %v593, %v594
    %v596 = vrot.slane %v595, 2
    %v597 = vadd.s32 %v595, %v596
    %v598 = vrot.slane %v597, 1
    %v599 = vadd.s32 %v597, %v598
    %vm600 = vcmp.ge.s32.totalorder %v599, 16
    %v601 = vsel %vm600, %v582, %v581
    %v602 = vadd.s32 %v601, 8
    %vm603 = vcmp.ge.s32.totalorder %v39, %v602
    %vm604 = vcmp.ge.s32.totalorder %v40, %v602
    %vm605 = vcmp.ge.s32.totalorder %v41, %v602
    %vm606 = vcmp.ge.s32.totalorder %v42, %v602
    %v607 = vsel %vm603, 1, 0
    %v608 = vsel %vm604, 1, 0
    %v609 = vsel %vm605, 1, 0
    %v610 = vsel %vm606, 1, 0
    %v611 = vadd.s32 %v607, %v608
    %v612 = vadd.s32 %v609, %v610
    %v613 = vadd.s32 %v611, %v612
    %v614 = vrot.slane %v613, 4
    %v615 = vadd.s32 %v613, %v614
    %v616 = vrot.slane %v615, 2
    %v617 = vadd.s32 %v615, %v616
    %v618 = vrot.slane %v617, 1
    %v619 = vadd.s32 %v617, %v618
    %vm620 = vcmp.ge.s32.totalorder %v619, 16
    %v621 = vsel %vm620, %v602, %v601
    %v622 = vadd.s32 %v621, 4
    %vm623 = vcmp.ge.s32.totalorder %v39, %v622
    %vm624 = vcmp.ge.s32.totalorder %v40, %v622
    %vm625 = vcmp.ge.s32.totalorder %v41, %v622
    %vm626 = vcmp.ge.s32.totalorder %v42, %v622
    %v627 = vsel %vm623, 1, 0
    %v628 = vsel %vm624, 1, 0
    %v629 = vsel %vm625, 1, 0
    %v630 = vsel %vm626, 1, 0
    %v631 = vadd.s32 %v627, %v628
    %v632 = vadd.s32 %v629, %v630
    %v633 = vadd.s32 %v631, %v632
    %v634 = vrot.slane %v633, 4
    %v635 = vadd.s32 %v633, %v634
    %v636 = vrot.slane %v635, 2
    %v637 = vadd.s32 %v635, %v636
    %v638 = vrot.slane %v637, 1
    %v639 = vadd.s32 %v637, %v638
    %vm640 = vcmp.ge.s32.totalorder %v639, 16
    %v641 = vsel %vm640, %v622, %v621
    %v642 = vadd.s32 %v641, 2
    %vm643 = vcmp.ge.s32.totalorder %v39, %v642
    %vm644 = vcmp.ge.s32.totalorder %v40, %v642
    %vm645 = vcmp.ge.s32.totalorder %v41, %v642
    %vm646 = vcmp.ge.s32.totalorder %v42, %v642
    %v647 = vsel %vm643, 1, 0
    %v648 = vsel %vm644, 1, 0
    %v649 = vsel %vm645, 1, 0
    %v650 = vsel %vm646, 1, 0
    %v651 = vadd.s32 %v647, %v648
    %v652 = vadd.s32 %v649, %v650
    %v653 = vadd.s32 %v651, %v652
    %v654 = vrot.slane %v653, 4
    %v655 = vadd.s32 %v653, %v654
    %v656 = vrot.slane %v655, 2
    %v657 = vadd.s32 %v655, %v656
    %v658 = vrot.slane %v657, 1
    %v659 = vadd.s32 %v657, %v658
    %vm660 = vcmp.ge.s32.totalorder %v659, 16
    %v661 = vsel %vm660, %v642, %v641
    %v662 = vadd.s32 %v661, 1
    %vm663 = vcmp.ge.s32.totalorder %v39, %v662
    %vm664 = vcmp.ge.s32.totalorder %v40, %v662
    %vm665 = vcmp.ge.s32.totalorder %v41, %v662
    %vm666 = vcmp.ge.s32.totalorder %v42, %v662
    %v667 = vsel %vm663, 1, 0
    %v668 = vsel %vm664, 1, 0
    %v669 = vsel %vm665, 1, 0
    %v670 = vsel %vm666, 1, 0
    %v671 = vadd.s32 %v667, %v668
    %v672 = vadd.s32 %v669, %v670
    %v673 = vadd.s32 %v671, %v672
    %v674 = vrot.slane %v673, 4
    %v675 = vadd.s32 %v673, %v674
    %v676 = vrot.slane %v675, 2
    %v677 = vadd.s32 %v675, %v676
    %v678 = vrot.slane %v677, 1
    %v679 = vadd.s32 %v677, %v678
    %vm680 = vcmp.ge.s32.totalorder %v679, 16
    %v681 = vsel %vm680, %v662, %v661
    %vm682 = vcmp.ge.s32.totalorder %v39, %v681
    %vm683 = vcmp.ge.s32.totalorder %v40, %v681
    %vm684 = vcmp.ge.s32.totalorder %v41, %v681
    %vm685 = vcmp.ge.s32.totalorder %v42, %v681
    %v686 = vsel %vm682, %v23, 0.0
    %v687 = vsel %vm683, %v24, 0.0
    %v688 = vsel %vm684, %v25, 0.0
    %v689 = vsel %vm685, %v26, 0.0
    %690 = vst [vmem:[#allocation5] sm:$0xff] %v686
    %691 = vst [vmem:[#allocation5 + $0x8] sm:$0xff] %v687
    %692 = vst [vmem:[#allocation5 + $0x10] sm:$0xff] %v688
    %693 = vst [vmem:[#allocation5 + $0x18] sm:$0xff] %v689
    // Predicated region
    $region10: #{tpu_custom_call.1} parent=1 // pred_check
      _
    $region11: #{tpu_custom_call.1} parent=1 // pred_check_branch
      %695 = sbr.rel (0) target = $region13
    $region12: #{tpu_custom_call.1} parent=1 // pred_region
      %s697 = ssub.s32 512, 512
      %698 = vsyncadd [#allocation4], %s697
      %s699 = sshll.u32 [#allocation5], 4
      %s700 = int_to_ptr.vmem [resolvable:$true] %s699
      %705 = dma.vmem_to_hbm [thread:$0]  %s700, 512, %s1, [#allocation4], 128, 128, 8
    $region13: #{tpu_custom_call.1} parent=1 // pred_fallthru
      _
    // Predicated region
    $region14: #{tpu_custom_call.1} parent=1 // pred_check
      _
    $region15: #{tpu_custom_call.1} parent=1 // pred_check_branch
      %707 = sbr.rel (0) target = $region17
    $region16: #{tpu_custom_call.1} parent=1 // pred_region
      %708 = dma.done [#allocation4], 512
    $region17: #{tpu_custom_call.1} parent=1 // pred_fallthru
      _
    %709 = vsyncpa [#allocation3], 1
    %710 = vsyncpa [#allocation4], 1

</llo_original>
